<compile_context>
chip_gen: v6e
topology: v6e:2x2x1
jax: 0.10.0
libtpu: 0.0.40
codegen_flags: <defaults>
</compile_context>

<pallas_src>
import functools

import jax
import jax.numpy as jnp
from jax.experimental import pallas as pl
from jax.experimental.pallas import tpu as pltpu

LANE = 128       # lane (last-dim) granularity
SUBLANE = 8      # sublane (second-last dim) granularity
MAX_TILE_B = 512 # batch-tile cap: safe for v7x's 64 MiB VMEM, plenty for v5e/v6e


def _round_up(n, m):
    return ((n + m - 1) // m) * m


def make_ann_kernel(num_linears):
    """Fused: Linear -> [ReLU, (Dropout), Linear]* -> ReLU -> Linear."""

    def kernel(*refs):
        # refs = (x_ref, w0, b0, w1, b1, ..., out_ref)
        x_ref = refs[0]
        out_ref = refs[-1]
        param_refs = refs[1:-1]
        assert len(param_refs) == 2 * num_linears

        h = x_ref[...]                        # bf16 activations [TILE_B, in_pad]
        acc = None
        for li in range(num_linears):
            w = param_refs[2 * li][...]       # bf16 [in_pad, out_pad], VMEM-resident
            b = param_refs[2 * li + 1][...]   # f32  [1, out_pad]
            if li > 0:
                # ReLU precedes every linear after the input layer; keep it in f32.
                # TODO(synk): nn.Dropout is identity in eval mode; training-mode
                # stochastic dropout (pltpu.prng_*) intentionally omitted.
                h = jnp.maximum(acc, 0.0).astype(jnp.bfloat16)
            acc = jnp.dot(h, w, preferred_element_type=jnp.float32) + b
        out_ref[...] = acc

    return kernel


def init_ann_params(key, input_dim, hidden_dims, output_dim):
    """PyTorch-style uniform(-1/sqrt(fan_in), 1/sqrt(fan_in)) init."""
    dims = [input_dim] + list(hidden_dims) + [output_dim]
    params = []
    for i in range(len(dims) - 1):
        fan_in, fan_out = dims[i], dims[i + 1]
        key, kw, kb = jax.random.split(key, 3)
        bound = 1.0 / jnp.sqrt(jnp.float32(fan_in))
        w = jax.random.uniform(kw, (fan_in, fan_out), jnp.float32, -bound, bound)
        b = jax.random.uniform(kb, (1, fan_out), jnp.float32, -bound, bound)
        params.append((w, b))
    return params


@functools.partial(jax.jit, static_argnames=("num_linears",))
def ann_forward(x, flat_params, num_linears):
    batch, input_dim = x.shape
    output_dim = flat_params[-1].shape[-1]

    ws = flat_params[0::2]
    bs = flat_params[1::2]
    in_dims = [w.shape[0] for w in ws]
    out_dims = [w.shape[1] for w in ws]
    in_pads = [_round_up(d, LANE) for d in in_dims]
    out_pads = [_round_up(d, LANE) for d in out_dims]

    tile_b = min(MAX_TILE_B, _round_up(batch, SUBLANE))
    batch_pad = _round_up(batch, tile_b)

    # Zero-pad operands (zeros are exact through matmul/ReLU) + cast matmul
    # operands to bf16 once, in the wrapper.
    x_p = jnp.pad(x.astype(jnp.bfloat16),
                  ((0, batch_pad - batch), (0, in_pads[0] - input_dim)))
    padded_params = []
    for w, b, ip, op in zip(ws, bs, in_pads, out_pads):
        w_p = jnp.pad(w.astype(jnp.bfloat16),
                      ((0, ip - w.shape[0]), (0, op - w.shape[1])))
        b_p = jnp.pad(b.astype(jnp.float32), ((0, 0), (0, op - b.shape[1])))
        padded_params += [w_p, b_p]

    in_specs = [pl.BlockSpec((tile_b, in_pads[0]), lambda i: (i, 0))]
    for ip, op in zip(in_pads, out_pads):
        in_specs.append(pl.BlockSpec((ip, op), lambda i: (0, 0)))  # weight: resident
        in_specs.append(pl.BlockSpec((1, op), lambda i: (0, 0)))   # bias:   resident
    out_specs = pl.BlockSpec((tile_b, out_pads[-1]), lambda i: (i, 0))

    out_p = pl.pallas_call(
        make_ann_kernel(num_linears),
        out_shape=jax.ShapeDtypeStruct((batch_pad, out_pads[-1]), jnp.float32),
        grid=(batch_pad // tile_b,),
        in_specs=in_specs,
        out_specs=out_specs,
        compiler_params=pltpu.CompilerParams(
            dimension_semantics=("parallel",),
            vmem_limit_bytes=32 * 1024 * 1024,
        ),
    )(x_p, *padded_params)

    return out_p[:batch, :output_dim]


def ann_reference_bf16(x, params):
    """Pure-JAX reference matching kernel arithmetic (bf16 operands, f32 acc)."""
    h = x.astype(jnp.bfloat16)
    acc = None
    for li, (w, b) in enumerate(params):
        if li > 0:
            h = jnp.maximum(acc, 0.0).astype(jnp.bfloat16)
        acc = jnp.dot(h, w.astype(jnp.bfloat16),
                      preferred_element_type=jnp.float32) + b
    return acc


def ann_reference_f32(x, params):
    h = x
    for li, (w, b) in enumerate(params):
        if li > 0:
            h = jnp.maximum(h, 0.0)
        h = h @ w + b
    return h


if __name__ == "__main__":
    # Small shapes consistent with ANN(input_dim=16, hidden_dims=[32, 64], output_dim=1)
    batch = 8
    input_dim = 16
    hidden_dims = [32, 64]
    output_dim = 1

    key = jax.random.PRNGKey(0)
    key, kx = jax.random.split(key)
    x = jax.random.normal(kx, (batch, input_dim), jnp.float32)

    params = init_ann_params(key, input_dim, hidden_dims, output_dim)
    flat_params = tuple(p for wb in params for p in wb)
    num_linears = len(params)

    out = ann_forward(x, flat_params, num_linears)
    out = jax.block_until_ready(out)

    assert out.shape == (batch, output_dim), out.shape
    ref_bf16 = ann_reference_bf16(x, params)
    ref_f32 = ann_reference_f32(x, params)
    assert jnp.allclose(out, ref_bf16, atol=1e-2, rtol=1e-2), (out, ref_bf16)
    assert jnp.allclose(out, ref_f32, atol=5e-2, rtol=5e-2), (out, ref_f32)

    print("KERNEL_OK")
</pallas_src>

<mosaic_0001>
module attributes {stable_mosaic.version = 11 : i64} {
  func.func @kernel(%arg0: i32, %arg1: memref<8x128xbf16, #tpu.memory_space<vmem>>, %arg2: memref<128x128xbf16, #tpu.memory_space<vmem>>, %arg3: memref<1x128xf32, #tpu.memory_space<vmem>>, %arg4: memref<128x128xbf16, #tpu.memory_space<vmem>>, %arg5: memref<1x128xf32, #tpu.memory_space<vmem>>, %arg6: memref<128x128xbf16, #tpu.memory_space<vmem>>, %arg7: memref<1x128xf32, #tpu.memory_space<vmem>>, %arg8: memref<8x128xf32, #tpu.memory_space<vmem>>) attributes {dimension_semantics = [#tpu.dimension_semantics<parallel>], iteration_bounds = array<i64: 1>, scalar_prefetch = 0 : i64, scratch_operands = 0 : i64, tpu.core_type = #tpu.core_type<tc>, window_params = [{transform_indices = @transform_0, window_bounds = array<i64: 8, 128>}, {pipeline_mode = #tpu.pipeline_mode<synchronous>, transform_indices = @transform_1, window_bounds = array<i64: 128, 128>}, {pipeline_mode = #tpu.pipeline_mode<synchronous>, transform_indices = @transform_2, window_bounds = array<i64: 1, 128>}, {pipeline_mode = #tpu.pipeline_mode<synchronous>, transform_indices = @transform_3, window_bounds = array<i64: 128, 128>}, {pipeline_mode = #tpu.pipeline_mode<synchronous>, transform_indices = @transform_4, window_bounds = array<i64: 1, 128>}, {pipeline_mode = #tpu.pipeline_mode<synchronous>, transform_indices = @transform_5, window_bounds = array<i64: 128, 128>}, {pipeline_mode = #tpu.pipeline_mode<synchronous>, transform_indices = @transform_6, window_bounds = array<i64: 1, 128>}, {transform_indices = @transform_7, window_bounds = array<i64: 8, 128>}]} {
    %c0 = arith.constant 0 : index
    %c0_0 = arith.constant 0 : index
    %0 = vector.load %arg1[%c0, %c0_0] : memref<8x128xbf16, #tpu.memory_space<vmem>>, vector<8x128xbf16>
    %c0_1 = arith.constant 0 : index
    %c0_2 = arith.constant 0 : index
    %1 = vector.load %arg2[%c0_1, %c0_2] : memref<128x128xbf16, #tpu.memory_space<vmem>>, vector<128x128xbf16>
    %c0_3 = arith.constant 0 : index
    %c0_4 = arith.constant 0 : index
    %2 = vector.load %arg3[%c0_3, %c0_4] : memref<1x128xf32, #tpu.memory_space<vmem>>, vector<1x128xf32>
    %cst = arith.constant dense<0.000000e+00> : vector<8x128xf32>
    %3 = tpu.matmul %0, %1, %cst {dimension_numbers = #tpu.dot_dimension_numbers<[1], [0], [0], [1], [0, 0, 1, 1], [], []>} : vector<8x128xbf16>, vector<128x128xbf16>, vector<8x128xf32> -> vector<8x128xf32>
    %4 = vector.broadcast %2 : vector<1x128xf32> to vector<8x128xf32>
    %5 = arith.addf %3, %4 : vector<8x128xf32>
    %c0_5 = arith.constant 0 : index
    %c0_6 = arith.constant 0 : index
    %6 = vector.load %arg4[%c0_5, %c0_6] : memref<128x128xbf16, #tpu.memory_space<vmem>>, vector<128x128xbf16>
    %c0_7 = arith.constant 0 : index
    %c0_8 = arith.constant 0 : index
    %7 = vector.load %arg5[%c0_7, %c0_8] : memref<1x128xf32, #tpu.memory_space<vmem>>, vector<1x128xf32>
    %cst_9 = arith.constant 0.000000e+00 : f32
    %8 = vector.broadcast %cst_9 : f32 to vector<8x128xf32>
    %9 = arith.maximumf %5, %8 : vector<8x128xf32>
    %10 = arith.truncf %9 : vector<8x128xf32> to vector<8x128xbf16>
    %cst_10 = arith.constant dense<0.000000e+00> : vector<8x128xf32>
    %11 = tpu.matmul %10, %6, %cst_10 {dimension_numbers = #tpu.dot_dimension_numbers<[1], [0], [0], [1], [0, 0, 1, 1], [], []>} : vector<8x128xbf16>, vector<128x128xbf16>, vector<8x128xf32> -> vector<8x128xf32>
    %12 = vector.broadcast %7 : vector<1x128xf32> to vector<8x128xf32>
    %13 = arith.addf %11, %12 : vector<8x128xf32>
    %c0_11 = arith.constant 0 : index
    %c0_12 = arith.constant 0 : index
    %14 = vector.load %arg6[%c0_11, %c0_12] : memref<128x128xbf16, #tpu.memory_space<vmem>>, vector<128x128xbf16>
    %c0_13 = arith.constant 0 : index
    %c0_14 = arith.constant 0 : index
    %15 = vector.load %arg7[%c0_13, %c0_14] : memref<1x128xf32, #tpu.memory_space<vmem>>, vector<1x128xf32>
    %cst_15 = arith.constant 0.000000e+00 : f32
    %16 = vector.broadcast %cst_15 : f32 to vector<8x128xf32>
    %17 = arith.maximumf %13, %16 : vector<8x128xf32>
    %18 = arith.truncf %17 : vector<8x128xf32> to vector<8x128xbf16>
    %cst_16 = arith.constant dense<0.000000e+00> : vector<8x128xf32>
    %19 = tpu.matmul %18, %14, %cst_16 {dimension_numbers = #tpu.dot_dimension_numbers<[1], [0], [0], [1], [0, 0, 1, 1], [], []>} : vector<8x128xbf16>, vector<128x128xbf16>, vector<8x128xf32> -> vector<8x128xf32>
    %20 = vector.broadcast %15 : vector<1x128xf32> to vector<8x128xf32>
    %21 = arith.addf %19, %20 : vector<8x128xf32>
    %c0_17 = arith.constant 0 : index
    %c0_18 = arith.constant 0 : index
    %22 = vector.load %arg8[%c0_17, %c0_18] : memref<8x128xf32, #tpu.memory_space<vmem>>, vector<8x128xf32>
    tpu.vector_store %arg8[%c0_17, %c0_18], %21 {strides = array<i32>} : memref<8x128xf32, #tpu.memory_space<vmem>>, vector<8x128xf32>,
    return
  }
  func.func @transform_0(%arg0: i32) -> (i32, i32) {
    %c0_i32 = arith.constant 0 : i32
    %c0_i32_0 = arith.constant 0 : i32
    return %arg0, %c0_i32 : i32, i32
  }
  func.func @transform_1(%arg0: i32) -> (i32, i32) {
    %c0_i32 = arith.constant 0 : i32
    %c0_i32_0 = arith.constant 0 : i32
    %c0_i32_1 = arith.constant 0 : i32
    return %c0_i32, %c0_i32_0 : i32, i32
  }
  func.func @transform_2(%arg0: i32) -> (i32, i32) {
    %c0_i32 = arith.constant 0 : i32
    %c0_i32_0 = arith.constant 0 : i32
    %c0_i32_1 = arith.constant 0 : i32
    return %c0_i32, %c0_i32_0 : i32, i32
  }
  func.func @transform_3(%arg0: i32) -> (i32, i32) {
    %c0_i32 = arith.constant 0 : i32
    %c0_i32_0 = arith.constant 0 : i32
    %c0_i32_1 = arith.constant 0 : i32
    return %c0_i32, %c0_i32_0 : i32, i32
  }
  func.func @transform_4(%arg0: i32) -> (i32, i32) {
    %c0_i32 = arith.constant 0 : i32
    %c0_i32_0 = arith.constant 0 : i32
    %c0_i32_1 = arith.constant 0 : i32
    return %c0_i32, %c0_i32_0 : i32, i32
  }
  func.func @transform_5(%arg0: i32) -> (i32, i32) {
    %c0_i32 = arith.constant 0 : i32
    %c0_i32_0 = arith.constant 0 : i32
    %c0_i32_1 = arith.constant 0 : i32
    return %c0_i32, %c0_i32_0 : i32, i32
  }
  func.func @transform_6(%arg0: i32) -> (i32, i32) {
    %c0_i32 = arith.constant 0 : i32
    %c0_i32_0 = arith.constant 0 : i32
    %c0_i32_1 = arith.constant 0 : i32
    return %c0_i32, %c0_i32_0 : i32, i32
  }
  func.func @transform_7(%arg0: i32) -> (i32, i32) {
    %c0_i32 = arith.constant 0 : i32
    %c0_i32_0 = arith.constant 0 : i32
    return %arg0, %c0_i32 : i32, i32
  }
}

</mosaic_0001>

<llo_original>
// kernel: ann_forward.1
$region0: #{ann_forward.1}
  #allocation0 [shape = 'u32[]', space=smem, size = 0x4, offset = 0x4, fixed_abs, tag = 'smem constant byte address 0x4 - core index']
  #allocation1 [shape = 'u32[144,128]{1,0:T(1,128)}', space=vmem, size = 0x12000, scoped, tag = 'internal scratch']
  %s0 = inlined_call_operand.vmem [shape: bf16[8,128], index: 0, kind: input, shape index: {}]
  %s1 = inlined_call_operand.vmem [shape: bf16[128,128], index: 1, kind: input, shape index: {}]
  %s2 = inlined_call_operand.vmem [shape: f32[1,128], index: 2, kind: input, shape index: {}]
  %s3 = inlined_call_operand.vmem [shape: bf16[128,128], index: 3, kind: input, shape index: {}]
  %s4 = inlined_call_operand.vmem [shape: f32[1,128], index: 4, kind: input, shape index: {}]
  %s5 = inlined_call_operand.vmem [shape: bf16[128,128], index: 5, kind: input, shape index: {}]
  %s6 = inlined_call_operand.vmem [shape: f32[1,128], index: 6, kind: input, shape index: {}]
  %s7 = inlined_call_operand.vmem [shape: f32[8,128], index: 7, kind: output, shape index: {}]
  %s8 = sld [smem:[#allocation0]]
  $region38: #{ann_forward.1} parent=0
    _
  %s10 = ssub.s32 1, %s8
  %s11 = scalar_select 0, %s10, %s8
  // Predicated region
  $region2: #{ann_forward.1} parent=0 // pred_check
    _
  $region3: #{ann_forward.1} parent=0 // pred_check_branch
    %13 = sbr.rel (0) target = $region5
  $region4: #{ann_forward.1} parent=0 // pred_region
    _
  $region5: #{ann_forward.1} parent=0 // pred_fallthru
    _
  // Predicated region
  $region6: #{ann_forward.1} parent=0 // pred_check
    _
  $region7: #{ann_forward.1} parent=0 // pred_check_branch
    %15 = sbr.rel (0) target = $region9
  $region8: #{ann_forward.1} parent=0 // pred_region
    _
  $region9: #{ann_forward.1} parent=0 // pred_fallthru
    _
  // Predicated region
  $region10: #{ann_forward.1} parent=0 // pred_check
    _
  $region11: #{ann_forward.1} parent=0 // pred_check_branch
    %17 = sbr.rel (0) target = $region13
  $region12: #{ann_forward.1} parent=0 // pred_region
    _
  $region13: #{ann_forward.1} parent=0 // pred_fallthru
    _
  // Predicated region
  $region14: #{ann_forward.1} parent=0 // pred_check
    _
  $region15: #{ann_forward.1} parent=0 // pred_check_branch
    %19 = sbr.rel (0) target = $region17
  $region16: #{ann_forward.1} parent=0 // pred_region
    _
  $region17: #{ann_forward.1} parent=0 // pred_fallthru
    _
  // Predicated region
  $region18: #{ann_forward.1} parent=0 // pred_check
    _
  $region19: #{ann_forward.1} parent=0 // pred_check_branch
    %21 = sbr.rel (0) target = $region21
  $region20: #{ann_forward.1} parent=0 // pred_region
    _
  $region21: #{ann_forward.1} parent=0 // pred_fallthru
    _
  // Predicated region
  $region22: #{ann_forward.1} parent=0 // pred_check
    _
  $region23: #{ann_forward.1} parent=0 // pred_check_branch
    %23 = sbr.rel (0) target = $region25
  $region24: #{ann_forward.1} parent=0 // pred_region
    _
  $region25: #{ann_forward.1} parent=0 // pred_fallthru
    _
  // Predicated region
  $region26: #{ann_forward.1} parent=0 // pred_check
    _
  $region27: #{ann_forward.1} parent=0 // pred_check_branch
    %25 = sbr.rel (0) target = $region29
  $region28: #{ann_forward.1} parent=0 // pred_region
    _
  $region29: #{ann_forward.1} parent=0 // pred_fallthru
    _
  %v27 = vld [vmem:[%s0] sm:$0xf]
  %v28 = vld [vmem:[%s1] sm:$0xf]
  %v29 = vld [vmem:[%s1 + $0x4] sm:$0xf]
  %v30 = vld [vmem:[%s1 + $0x8] sm:$0xf]
  %v31 = vld [vmem:[%s1 + $0xc] sm:$0xf]
  %v32 = vld [vmem:[%s1 + $0x10] sm:$0xf]
  %v33 = vld [vmem:[%s1 + $0x14] sm:$0xf]
  %v34 = vld [vmem:[%s1 + $0x18] sm:$0xf]
  %v35 = vld [vmem:[%s1 + $0x1c] sm:$0xf]
  %v36 = vld [vmem:[%s1 + $0x20] sm:$0xf]
  %v37 = vld [vmem:[%s1 + $0x24] sm:$0xf]
  %v38 = vld [vmem:[%s1 + $0x28] sm:$0xf]
  %v39 = vld [vmem:[%s1 + $0x2c] sm:$0xf]
  %v40 = vld [vmem:[%s1 + $0x30] sm:$0xf]
  %v41 = vld [vmem:[%s1 + $0x34] sm:$0xf]
  %v42 = vld [vmem:[%s1 + $0x38] sm:$0xf]
  %v43 = vld [vmem:[%s1 + $0x3c] sm:$0xf]
  %v44 = vld [vmem:[%s2] sm:$0x1]
  %v46 = vlaneseq
  %v47 = vshrl.u32 %v46, 7
  %v48 = vsub.s32 0, %v47
  %v49 = vrot.slane %v44, %v48
  %v67 = vunpack.c.l.b16 %v28
  %v68 = vunpack.c.l.b16 %v29
  %v69 = vunpack.c.l.b16 %v30
  %v70 = vunpack.c.l.b16 %v31
  %v71 = vunpack.c.l.b16 %v32
  %v72 = vunpack.c.l.b16 %v33
  %v73 = vunpack.c.l.b16 %v34
  %v74 = vunpack.c.l.b16 %v35
  %v75 = vunpack.c.l.b16 %v36
  %v76 = vunpack.c.l.b16 %v37
  %v77 = vunpack.c.l.b16 %v38
  %v78 = vunpack.c.l.b16 %v39
  %v79 = vunpack.c.l.b16 %v40
  %v80 = vunpack.c.l.b16 %v41
  %v81 = vunpack.c.l.b16 %v42
  %v82 = vunpack.c.l.b16 %v43
  %v83 = vpack.c.b16 %v68, %v67
  %v84 = vpack.c.b16 %v70, %v69
  %v85 = vpack.c.b16 %v72, %v71
  %v86 = vpack.c.b16 %v74, %v73
  %v87 = vpack.c.b16 %v76, %v75
  %v88 = vpack.c.b16 %v78, %v77
  %v89 = vpack.c.b16 %v80, %v79
  %v90 = vpack.c.b16 %v82, %v81
  %99 = vmatprep.subr.bf16.mxu0 0
  %100 = vmatpush1.bf16.msra.mxu0 %v90
  %101 = vmatprep.subr.bf16.mxu0 0
  %102 = vmatpush1.bf16.msra.mxu0 %v89
  %103 = vmatprep.subr.bf16.mxu0 0
  %104 = vmatpush1.bf16.msra.mxu0 %v88
  %105 = vmatprep.subr.bf16.mxu0 0
  %106 = vmatpush1.bf16.msra.mxu0 %v87
  %107 = vmatprep.subr.bf16.mxu0 0
  %108 = vmatpush1.bf16.msra.mxu0 %v86
  %109 = vmatprep.subr.bf16.mxu0 0
  %110 = vmatpush1.bf16.msra.mxu0 %v85
  %111 = vmatprep.subr.bf16.mxu0 0
  %112 = vmatpush1.bf16.msra.mxu0 %v84
  %113 = vmatprep.subr.bf16.mxu0 0
  %114 = vmatpush1.bf16.msra.mxu0 %v83
  %115 = vmatprep.subr.bf16.mxu0 0
  %116 = vmatpush2.bf16.msra.mxu0 0
  %117 = vmatprep.subr.bf16.mxu0 0
  %118 = vmatpush2.bf16.msra.mxu0 0
  %119 = vmatprep.subr.bf16.mxu0 0
  %120 = vmatpush2.bf16.msra.mxu0 0
  %121 = vmatprep.subr.bf16.mxu0 0
  %122 = vmatpush2.bf16.msra.mxu0 0
  %123 = vmatprep.subr.bf16.mxu0 0
  %124 = vmatpush2.bf16.msra.mxu0 0
  %125 = vmatprep.subr.bf16.mxu0 0
  %126 = vmatpush2.bf16.msra.mxu0 0
  %127 = vmatprep.subr.bf16.mxu0 0
  %128 = vmatpush2.bf16.msra.mxu0 0
  %129 = vmatprep.subr.bf16.mxu0 0
  %130 = vmatpush2.bf16.msra.mxu0 0
  %131 = vmatprep.mubr.bf16.mxu0 0
  %132 = vmatmul.mubr.bf16.gmra.mxu0 %v27
  %v133 = vpop.f32.mrf.mxu0
  %v134 = vadd.f32 %v49, %v133
  %v135 = vpop.f32.mrf.mxu0
  %v136 = vpop.f32.mrf.mxu0
  %v137 = vpop.f32.mrf.mxu0
  %138 = vdwg.mxu0
  %v139 = vld [vmem:[%s3] sm:$0xf]
  %v140 = vld [vmem:[%s3 + $0x4] sm:$0xf]
  %v141 = vld [vmem:[%s3 + $0x8] sm:$0xf]
  %v142 = vld [vmem:[%s3 + $0xc] sm:$0xf]
  %v143 = vld [vmem:[%s3 + $0x10] sm:$0xf]
  %v144 = vld [vmem:[%s3 + $0x14] sm:$0xf]
  %v145 = vld [vmem:[%s3 + $0x18] sm:$0xf]
  %v146 = vld [vmem:[%s3 + $0x1c] sm:$0xf]
  %v147 = vld [vmem:[%s3 + $0x20] sm:$0xf]
  %v148 = vld [vmem:[%s3 + $0x24] sm:$0xf]
  %v149 = vld [vmem:[%s3 + $0x28] sm:$0xf]
  %v150 = vld [vmem:[%s3 + $0x2c] sm:$0xf]
  %v151 = vld [vmem:[%s3 + $0x30] sm:$0xf]
  %v152 = vld [vmem:[%s3 + $0x34] sm:$0xf]
  %v153 = vld [vmem:[%s3 + $0x38] sm:$0xf]
  %v154 = vld [vmem:[%s3 + $0x3c] sm:$0xf]
  %v155 = vld [vmem:[%s4] sm:$0x1]
  %v156 = vmax.f32 %v134, 0.0
  %v157 = vpack.c.bf16 %v156, %v156
  %v159 = vlaneseq
  %v160 = vshrl.u32 %v159, 7
  %v161 = vsub.s32 0, %v160
  %v162 = vrot.slane %v155, %v161
  %v180 = vunpack.c.l.b16 %v139
  %v181 = vunpack.c.l.b16 %v140
  %v182 = vunpack.c.l.b16 %v141
  %v183 = vunpack.c.l.b16 %v142
  %v184 = vunpack.c.l.b16 %v143
  %v185 = vunpack.c.l.b16 %v144
  %v186 = vunpack.c.l.b16 %v145
  %v187 = vunpack.c.l.b16 %v146
  %v188 = vunpack.c.l.b16 %v147
  %v189 = vunpack.c.l.b16 %v148
  %v190 = vunpack.c.l.b16 %v149
  %v191 = vunpack.c.l.b16 %v150
  %v192 = vunpack.c.l.b16 %v151
  %v193 = vunpack.c.l.b16 %v152
  %v194 = vunpack.c.l.b16 %v153
  %v195 = vunpack.c.l.b16 %v154
  %v196 = vpack.c.b16 %v181, %v180
  %v197 = vpack.c.b16 %v183, %v182
  %v198 = vpack.c.b16 %v185, %v184
  %v199 = vpack.c.b16 %v187, %v186
  %v200 = vpack.c.b16 %v189, %v188
  %v201 = vpack.c.b16 %v191, %v190
  %v202 = vpack.c.b16 %v193, %v192
  %v203 = vpack.c.b16 %v195, %v194
  %212 = vmatprep.subr.bf16.mxu0 0
  %213 = vmatpush1.bf16.msra.mxu0 %v203
  %214 = vmatprep.subr.bf16.mxu0 0
  %215 = vmatpush1.bf16.msra.mxu0 %v202
  %216 = vmatprep.subr.bf16.mxu0 0
  %217 = vmatpush1.bf16.msra.mxu0 %v201
  %218 = vmatprep.subr.bf16.mxu0 0
  %219 = vmatpush1.bf16.msra.mxu0 %v200
  %220 = vmatprep.subr.bf16.mxu0 0
  %221 = vmatpush1.bf16.msra.mxu0 %v199
  %222 = vmatprep.subr.bf16.mxu0 0
  %223 = vmatpush1.bf16.msra.mxu0 %v198
  %224 = vmatprep.subr.bf16.mxu0 0
  %225 = vmatpush1.bf16.msra.mxu0 %v197
  %226 = vmatprep.subr.bf16.mxu0 0
  %227 = vmatpush1.bf16.msra.mxu0 %v196
  %228 = vmatprep.subr.bf16.mxu0 0
  %229 = vmatpush2.bf16.msra.mxu0 0
  %230 = vmatprep.subr.bf16.mxu0 0
  %231 = vmatpush2.bf16.msra.mxu0 0
  %232 = vmatprep.subr.bf16.mxu0 0
  %233 = vmatpush2.bf16.msra.mxu0 0
  %234 = vmatprep.subr.bf16.mxu0 0
  %235 = vmatpush2.bf16.msra.mxu0 0
  %236 = vmatprep.subr.bf16.mxu0 0
  %237 = vmatpush2.bf16.msra.mxu0 0
  %238 = vmatprep.subr.bf16.mxu0 0
  %239 = vmatpush2.bf16.msra.mxu0 0
  %240 = vmatprep.subr.bf16.mxu0 0
  %241 = vmatpush2.bf16.msra.mxu0 0
  %242 = vmatprep.subr.bf16.mxu0 0
  %243 = vmatpush2.bf16.msra.mxu0 0
  %244 = vmatprep.mubr.bf16.mxu0 0
  %245 = vmatmul.mubr.bf16.gmra.mxu0 %v157
  %v246 = vpop.f32.mrf.mxu0
  %v247 = vadd.f32 %v162, %v246
  %v248 = vpop.f32.mrf.mxu0
  %v249 = vpop.f32.mrf.mxu0
  %v250 = vpop.f32.mrf.mxu0
  %251 = vdwg.mxu0
  %v252 = vld [vmem:[%s5] sm:$0xf]
  %v253 = vld [vmem:[%s5 + $0x4] sm:$0xf]
  %v254 = vld [vmem:[%s5 + $0x8] sm:$0xf]
  %v255 = vld [vmem:[%s5 + $0xc] sm:$0xf]
  %v256 = vld [vmem:[%s5 + $0x10] sm:$0xf]
  %v257 = vld [vmem:[%s5 + $0x14] sm:$0xf]
  %v258 = vld [vmem:[%s5 + $0x18] sm:$0xf]
  %v259 = vld [vmem:[%s5 + $0x1c] sm:$0xf]
  %v260 = vld [vmem:[%s5 + $0x20] sm:$0xf]
  %v261 = vld [vmem:[%s5 + $0x24] sm:$0xf]
  %v262 = vld [vmem:[%s5 + $0x28] sm:$0xf]
  %v263 = vld [vmem:[%s5 + $0x2c] sm:$0xf]
  %v264 = vld [vmem:[%s5 + $0x30] sm:$0xf]
  %v265 = vld [vmem:[%s5 + $0x34] sm:$0xf]
  %v266 = vld [vmem:[%s5 + $0x38] sm:$0xf]
  %v267 = vld [vmem:[%s5 + $0x3c] sm:$0xf]
  %v268 = vld [vmem:[%s6] sm:$0x1]
  %v269 = vmax.f32 %v247, 0.0
  %v270 = vpack.c.bf16 %v269, %v269
  %v272 = vlaneseq
  %v273 = vshrl.u32 %v272, 7
  %v274 = vsub.s32 0, %v273
  %v275 = vrot.slane %v268, %v274
  %v293 = vunpack.c.l.b16 %v252
  %v294 = vunpack.c.l.b16 %v253
  %v295 = vunpack.c.l.b16 %v254
  %v296 = vunpack.c.l.b16 %v255
  %v297 = vunpack.c.l.b16 %v256
  %v298 = vunpack.c.l.b16 %v257
  %v299 = vunpack.c.l.b16 %v258
  %v300 = vunpack.c.l.b16 %v259
  %v301 = vunpack.c.l.b16 %v260
  %v302 = vunpack.c.l.b16 %v261
  %v303 = vunpack.c.l.b16 %v262
  %v304 = vunpack.c.l.b16 %v263
  %v305 = vunpack.c.l.b16 %v264
  %v306 = vunpack.c.l.b16 %v265
  %v307 = vunpack.c.l.b16 %v266
  %v308 = vunpack.c.l.b16 %v267
  %v309 = vpack.c.b16 %v294, %v293
  %v310 = vpack.c.b16 %v296, %v295
  %v311 = vpack.c.b16 %v298, %v297
  %v312 = vpack.c.b16 %v300, %v299
  %v313 = vpack.c.b16 %v302, %v301
  %v314 = vpack.c.b16 %v304, %v303
  %v315 = vpack.c.b16 %v306, %v305
  %v316 = vpack.c.b16 %v308, %v307
  %325 = vmatprep.subr.bf16.mxu0 0
  %326 = vmatpush1.bf16.msra.mxu0 %v316
  %327 = vmatprep.subr.bf16.mxu0 0
  %328 = vmatpush1.bf16.msra.mxu0 %v315
  %329 = vmatprep.subr.bf16.mxu0 0
  %330 = vmatpush1.bf16.msra.mxu0 %v314
  %331 = vmatprep.subr.bf16.mxu0 0
  %332 = vmatpush1.bf16.msra.mxu0 %v313
  %333 = vmatprep.subr.bf16.mxu0 0
  %334 = vmatpush1.bf16.msra.mxu0 %v312
  %335 = vmatprep.subr.bf16.mxu0 0
  %336 = vmatpush1.bf16.msra.mxu0 %v311
  %337 = vmatprep.subr.bf16.mxu0 0
  %338 = vmatpush1.bf16.msra.mxu0 %v310
  %339 = vmatprep.subr.bf16.mxu0 0
  %340 = vmatpush1.bf16.msra.mxu0 %v309
  %341 = vmatprep.subr.bf16.mxu0 0
  %342 = vmatpush2.bf16.msra.mxu0 0
  %343 = vmatprep.subr.bf16.mxu0 0
  %344 = vmatpush2.bf16.msra.mxu0 0
  %345 = vmatprep.subr.bf16.mxu0 0
  %346 = vmatpush2.bf16.msra.mxu0 0
  %347 = vmatprep.subr.bf16.mxu0 0
  %348 = vmatpush2.bf16.msra.mxu0 0
  %349 = vmatprep.subr.bf16.mxu0 0
  %350 = vmatpush2.bf16.msra.mxu0 0
  %351 = vmatprep.subr.bf16.mxu0 0
  %352 = vmatpush2.bf16.msra.mxu0 0
  %353 = vmatprep.subr.bf16.mxu0 0
  %354 = vmatpush2.bf16.msra.mxu0 0
  %355 = vmatprep.subr.bf16.mxu0 0
  %356 = vmatpush2.bf16.msra.mxu0 0
  %357 = vmatprep.mubr.bf16.mxu0 0
  %358 = vmatmul.mubr.bf16.gmra.mxu0 %v270
  %v359 = vpop.f32.mrf.mxu0
  %v360 = vadd.f32 %v275, %v359
  %v361 = vpop.f32.mrf.mxu0
  %v362 = vpop.f32.mrf.mxu0
  %v363 = vpop.f32.mrf.mxu0
  %364 = vdwg.mxu0
  %365 = vst [vmem:[%s7] sm:$0xff] %v360
  // Predicated region
  $region30: #{ann_forward.1} parent=0 // pred_check
    _
  $region31: #{ann_forward.1} parent=0 // pred_check_branch
    %367 = sbr.rel (0) target = $region33
  $region32: #{ann_forward.1} parent=0 // pred_region
    _
  $region33: #{ann_forward.1} parent=0 // pred_fallthru
    _
  // Predicated region
  $region34: #{ann_forward.1} parent=0 // pred_check
    _
  $region35: #{ann_forward.1} parent=0 // pred_check_branch
    %369 = sbr.rel (0) target = $region37
  $region36: #{ann_forward.1} parent=0 // pred_region
    _
  $region37: #{ann_forward.1} parent=0 // pred_fallthru
    _

</llo_original>
